<compile_context>
chip_gen: v5e
topology: v5e:2x2
jax: 0.10.0
libtpu: 0.0.40
codegen_flags: <defaults>
</compile_context>

<pallas_src>
import functools

import jax
import jax.numpy as jnp
from jax import lax
from jax.experimental import pallas as pl
from jax.experimental.pallas import tpu as pltpu

IGNORE_INDEX = -100
_NEG_LARGE = -1e30  # pad value for the class axis; exp() underflows to 0


def _round_up(x, m):
    return (x + m - 1) // m * m


def _ce_kernel(pred_ref, trg_ref, out_ref, m_ref, s_ref, t_ref, *,
               ignore_index):
    j = pl.program_id(1)                        # class-tile index (innermost)

    @pl.when(j == 0)
    def _():
        m_ref[...] = jnp.full_like(m_ref, _NEG_LARGE)
        s_ref[...] = jnp.zeros_like(s_ref)
        t_ref[...] = jnp.zeros_like(t_ref)

    logits = pred_ref[...].astype(jnp.float32)  # (bn, bc), upcast in-kernel
    bn, bc = logits.shape
    tgt = trg_ref[...]                          # (bn, 1) int32 (resident)

    # --- online logsumexp over the class axis ---
    tile_max = jnp.max(logits, axis=-1, keepdims=True)            # (bn, 1)
    m_old = m_ref[...]
    m_new = jnp.maximum(m_old, tile_max)
    s_ref[...] = (s_ref[...] * jnp.exp(m_old - m_new)
                  + jnp.sum(jnp.exp(logits - m_new), axis=-1, keepdims=True))
    m_ref[...] = m_new

    # --- pick pred[i, trg[i]] for targets that fall inside this class tile ---
    cls_idx = j * bc + lax.broadcasted_iota(jnp.int32, (bn, bc), 1)
    onehot = cls_idx == tgt
    t_ref[...] += jnp.sum(jnp.where(onehot, logits, 0.0), axis=-1,
                          keepdims=True)

    # --- last class tile: emit this row tile's partial (sum, count) ---
    @pl.when(j == pl.num_programs(1) - 1)
    def _():
        lse = m_ref[...] + jnp.log(s_ref[...])                    # (bn, 1)
        valid = tgt != ignore_index
        per_row = jnp.where(valid, lse - t_ref[...], 0.0)
        part_sum = jnp.sum(per_row)
        part_cnt = jnp.sum(valid.astype(jnp.float32))
        sub = lax.broadcasted_iota(jnp.int32, (8, 128), 0)
        lane = lax.broadcasted_iota(jnp.int32, (8, 128), 1)
        out_ref[...] = jnp.where(
            (sub == 0) & (lane == 0), part_sum,
            jnp.where((sub == 0) & (lane == 1), part_cnt, 0.0))


def cross_entropy_loss(pred, trg, *, ignore_index=IGNORE_INDEX,
                       block_n=None, block_c=None):
    """pred: (N, C) float logits, trg: (N,) int labels. Returns scalar f32."""
    n, c = pred.shape
    dtype_bytes = jnp.dtype(pred.dtype).itemsize

    # Class tile: full (padded) C when small, 2048-lane tiles for big vocabs.
    if block_c is None:
        block_c = _round_up(c, 128) if c <= 2048 else 2048
    block_c = _round_up(block_c, 128)
    c_pad = _round_up(c, block_c)

    # Row tile from a conservative VMEM budget (double-buffered pred tile
    # kept under ~16 MiB: safe on v7x's 64 MiB and v5e/v6e's 128 MiB VMEM).
    if block_n is None:
        pred_budget = 16 * 1024 * 1024
        bn = max(8, pred_budget // (2 * block_c * dtype_bytes))
        block_n = min(bn, 1024, _round_up(n, 8))
    block_n = max(8, (block_n // 8) * 8)
    n_pad = _round_up(n, block_n)
    grid_n = n_pad // block_n
    grid_c = c_pad // block_c

    # Pad inputs: padded rows get ignore_index, padded classes underflow.
    pred_p = pred
    if c_pad != c:
        pred_p = jnp.pad(pred_p, ((0, 0), (0, c_pad - c)),
                         constant_values=_NEG_LARGE)
    if n_pad != n:
        pred_p = jnp.pad(pred_p, ((0, n_pad - n), (0, 0)))
    trg_p = trg.astype(jnp.int32)
    if n_pad != n:
        trg_p = jnp.pad(trg_p, (0, n_pad - n), constant_values=ignore_index)
    trg2d = trg_p.reshape(n_pad, 1)

    # VMEM actually needed (double-buffered pred/trg/out + scratch) + headroom.
    vmem_need = (2 * block_n * block_c * dtype_bytes
                 + 2 * block_n * 4
                 + 2 * 8 * 128 * 4
                 + 3 * block_n * 4)
    vmem_limit = int(min(vmem_need + (16 << 20), 48 << 20))

    cost = pl.CostEstimate(
        flops=int(6 * n_pad * c_pad),
        transcendentals=int(n_pad * c_pad),
        bytes_accessed=int(n_pad * c_pad * dtype_bytes + n_pad * 4
                           + grid_n * 8 * 128 * 4))

    kernel = functools.partial(_ce_kernel, ignore_index=ignore_index)
    partials = pl.pallas_call(
        kernel,
        out_shape=jax.ShapeDtypeStruct((grid_n * 8, 128), jnp.float32),
        grid_spec=pltpu.PrefetchScalarGridSpec(
            num_scalar_prefetch=0,
            grid=(grid_n, grid_c),
            in_specs=[
                pl.BlockSpec((block_n, block_c), lambda i, j: (i, j)),
                pl.BlockSpec((block_n, 1), lambda i, j: (i, 0)),  # resident
            ],
            out_specs=pl.BlockSpec((8, 128), lambda i, j: (i, 0)),
            scratch_shapes=[
                pltpu.VMEM((block_n, 1), jnp.float32),   # running max
                pltpu.VMEM((block_n, 1), jnp.float32),   # running exp-sum
                pltpu.VMEM((block_n, 1), jnp.float32),   # target logit
            ],
        ),
        compiler_params=pltpu.CompilerParams(
            dimension_semantics=("parallel", "arbitrary"),
            vmem_limit_bytes=vmem_limit),
        cost_estimate=cost,
    )(pred_p, trg2d)

    total = jnp.sum(partials[:, 0])
    count = jnp.sum(partials[:, 1])
    # TODO(synk): PyTorch returns NaN when every target is ignore_index;
    #             we guard with max(count, 1) to match the pure-JAX reference.
    return total / jnp.maximum(count, 1.0)


def _reference(pred, trg, ignore_index=IGNORE_INDEX):
    logits = pred.astype(jnp.float32)
    lse = jax.scipy.special.logsumexp(logits, axis=-1)
    safe_trg = jnp.where(trg == ignore_index, 0, trg)
    tgt = jnp.take_along_axis(logits, safe_trg[:, None], axis=-1)[:, 0]
    valid = trg != ignore_index
    per_row = jnp.where(valid, lse - tgt, 0.0)
    return jnp.sum(per_row) / jnp.maximum(jnp.sum(valid), 1)


if __name__ == "__main__":
    key = jax.random.PRNGKey(0)
    k1, k2, k3, k4 = jax.random.split(key, 4)

    # Test 1: ragged shapes (exercise row- and class-axis tail padding).
    N1, C1 = 19, 100
    pred1 = jax.random.normal(k1, (N1, C1), dtype=jnp.float32)
    trg1 = jax.random.randint(k2, (N1,), 0, C1, dtype=jnp.int32)
    trg1 = trg1.at[3].set(IGNORE_INDEX).at[10].set(IGNORE_INDEX)
    loss1 = jax.block_until_ready(cross_entropy_loss(pred1, trg1))
    ref1 = _reference(pred1, trg1)
    assert jnp.allclose(loss1, ref1, atol=1e-5, rtol=1e-5), (loss1, ref1)

    # Test 2: force a multi-tile (4 row-tiles x 2 class-tiles) grid with bf16
    # logits to exercise the online-logsumexp / partial-output path.
    N2, C2 = 32, 256
    pred2 = jax.random.normal(k3, (N2, C2), dtype=jnp.bfloat16)
    trg2 = jax.random.randint(k4, (N2,), 0, C2, dtype=jnp.int32)
    trg2 = trg2.at[0].set(IGNORE_INDEX)
    loss2 = jax.block_until_ready(
        cross_entropy_loss(pred2, trg2, block_n=8, block_c=128))
    ref2 = _reference(pred2, trg2)
    assert jnp.allclose(loss2, ref2, atol=1e-3, rtol=1e-3), (loss2, ref2)

    print("KERNEL_OK")
</pallas_src>

<mosaic_0001>
module attributes {stable_mosaic.version = 11 : i64} {
  func.func @_ce_kernel(%arg0: i32, %arg1: i32, %arg2: memref<24x128xf32, #tpu.memory_space<vmem>>, %arg3: memref<24x1xi32, #tpu.memory_space<vmem>>, %arg4: memref<8x128xf32, #tpu.memory_space<vmem>>, %arg5: memref<24x1xf32, #tpu.memory_space<vmem>>, %arg6: memref<24x1xf32, #tpu.memory_space<vmem>>, %arg7: memref<24x1xf32, #tpu.memory_space<vmem>>) attributes {dimension_semantics = [#tpu.dimension_semantics<parallel>, #tpu.dimension_semantics<arbitrary>], iteration_bounds = array<i64: 1, 1>, scalar_prefetch = 0 : i64, scratch_operands = 3 : i64, tpu.core_type = #tpu.core_type<tc>, window_params = [{transform_indices = @transform_0, window_bounds = array<i64: 24, 128>}, {transform_indices = @transform_1, window_bounds = array<i64: 24, 1>}, {transform_indices = @transform_2, window_bounds = array<i64: 8, 128>}]} {
    %c0_i32 = arith.constant 0 : i32
    %0 = arith.cmpi eq, %arg1, %c0_i32 : i32
    %1 = arith.extui %0 : i1 to i32
    %c0_i32_0 = arith.constant 0 : i32
    %2 = arith.cmpi ne, %1, %c0_i32_0 : i32
    scf.if %2 {
      %cst_21 = arith.constant -1.000000e+30 : f32
      %37 = vector.broadcast %cst_21 : f32 to vector<24x1xf32>
      %c0_22 = arith.constant 0 : index
      %c0_23 = arith.constant 0 : index
      %38 = vector.load %arg5[%c0_22, %c0_23] : memref<24x1xf32, #tpu.memory_space<vmem>>, vector<24x1xf32>
      tpu.vector_store %arg5[%c0_22, %c0_23], %37 {strides = array<i32>} : memref<24x1xf32, #tpu.memory_space<vmem>>, vector<24x1xf32>,
      %cst_24 = arith.constant 0.000000e+00 : f32
      %39 = vector.broadcast %cst_24 : f32 to vector<24x1xf32>
      %c0_25 = arith.constant 0 : index
      %c0_26 = arith.constant 0 : index
      %40 = vector.load %arg6[%c0_25, %c0_26] : memref<24x1xf32, #tpu.memory_space<vmem>>, vector<24x1xf32>
      tpu.vector_store %arg6[%c0_25, %c0_26], %39 {strides = array<i32>} : memref<24x1xf32, #tpu.memory_space<vmem>>, vector<24x1xf32>,
      %cst_27 = arith.constant 0.000000e+00 : f32
      %41 = vector.broadcast %cst_27 : f32 to vector<24x1xf32>
      %c0_28 = arith.constant 0 : index
      %c0_29 = arith.constant 0 : index
      %42 = vector.load %arg7[%c0_28, %c0_29] : memref<24x1xf32, #tpu.memory_space<vmem>>, vector<24x1xf32>
      tpu.vector_store %arg7[%c0_28, %c0_29], %41 {strides = array<i32>} : memref<24x1xf32, #tpu.memory_space<vmem>>, vector<24x1xf32>,
    } else {
    }
    %c0 = arith.constant 0 : index
    %c0_1 = arith.constant 0 : index
    %3 = vector.load %arg2[%c0, %c0_1] : memref<24x128xf32, #tpu.memory_space<vmem>>, vector<24x128xf32>
    %c0_2 = arith.constant 0 : index
    %c0_3 = arith.constant 0 : index
    %4 = vector.load %arg3[%c0_2, %c0_3] : memref<24x1xi32, #tpu.memory_space<vmem>>, vector<24x1xi32>
    %cst = arith.constant dense<0xFF800000> : vector<24xf32>
    %5 = vector.multi_reduction <maximumf>, %3, %cst [1] : vector<24x128xf32> to vector<24xf32>
    %6 = vector.shape_cast %5 : vector<24xf32> to vector<24x1xf32>
    %c0_4 = arith.constant 0 : index
    %c0_5 = arith.constant 0 : index
    %7 = vector.load %arg5[%c0_4, %c0_5] : memref<24x1xf32, #tpu.memory_space<vmem>>, vector<24x1xf32>
    %8 = arith.maximumf %7, %6 : vector<24x1xf32>
    %c0_6 = arith.constant 0 : index
    %c0_7 = arith.constant 0 : index
    %9 = vector.load %arg6[%c0_6, %c0_7] : memref<24x1xf32, #tpu.memory_space<vmem>>, vector<24x1xf32>
    %10 = arith.subf %7, %8 : vector<24x1xf32>
    %11 = math.exp %10 : vector<24x1xf32>
    %12 = arith.mulf %9, %11 : vector<24x1xf32>
    %13 = vector.broadcast %8 : vector<24x1xf32> to vector<24x128xf32>
    %14 = arith.subf %3, %13 : vector<24x128xf32>
    %15 = math.exp %14 : vector<24x128xf32>
    %cst_8 = arith.constant dense<0.000000e+00> : vector<24xf32>
    %16 = vector.multi_reduction <add>, %15, %cst_8 [1] : vector<24x128xf32> to vector<24xf32>
    %17 = vector.shape_cast %16 : vector<24xf32> to vector<24x1xf32>
    %18 = arith.addf %12, %17 : vector<24x1xf32>
    %c0_9 = arith.constant 0 : index
    %c0_10 = arith.constant 0 : index
    %19 = vector.load %arg6[%c0_9, %c0_10] : memref<24x1xf32, #tpu.memory_space<vmem>>, vector<24x1xf32>
    tpu.vector_store %arg6[%c0_9, %c0_10], %18 {strides = array<i32>} : memref<24x1xf32, #tpu.memory_space<vmem>>, vector<24x1xf32>,
    %c0_11 = arith.constant 0 : index
    %c0_12 = arith.constant 0 : index
    %20 = vector.load %arg5[%c0_11, %c0_12] : memref<24x1xf32, #tpu.memory_space<vmem>>, vector<24x1xf32>
    tpu.vector_store %arg5[%c0_11, %c0_12], %8 {strides = array<i32>} : memref<24x1xf32, #tpu.memory_space<vmem>>, vector<24x1xf32>,
    %c128_i32 = arith.constant 128 : i32
    %21 = arith.muli %arg1, %c128_i32 : i32
    %22 = tpu.iota {dimensions = array<i32: 1>} : vector<24x128xi32>
    %23 = vector.broadcast %21 : i32 to vector<24x128xi32>
    %24 = arith.addi %23, %22 : vector<24x128xi32>
    %25 = vector.broadcast %4 : vector<24x1xi32> to vector<24x128xi32>
    %26 = arith.cmpi eq, %24, %25 : vector<24x128xi32>
    %c0_13 = arith.constant 0 : index
    %c0_14 = arith.constant 0 : index
    %27 = vector.load %arg7[%c0_13, %c0_14] : memref<24x1xf32, #tpu.memory_space<vmem>>, vector<24x1xf32>
    %cst_15 = arith.constant 0.000000e+00 : f32
    %28 = vector.broadcast %cst_15 : f32 to vector<24x128xf32>
    %29 = arith.select %26, %3, %28 : vector<24x128xi1>, vector<24x128xf32>
    %cst_16 = arith.constant dense<0.000000e+00> : vector<24xf32>
    %30 = vector.multi_reduction <add>, %29, %cst_16 [1] : vector<24x128xf32> to vector<24xf32>
    %31 = vector.shape_cast %30 : vector<24xf32> to vector<24x1xf32>
    %32 = arith.addf %27, %31 : vector<24x1xf32>
    %c0_17 = arith.constant 0 : index
    %c0_18 = arith.constant 0 : index
    %33 = vector.load %arg7[%c0_17, %c0_18] : memref<24x1xf32, #tpu.memory_space<vmem>>, vector<24x1xf32>
    tpu.vector_store %arg7[%c0_17, %c0_18], %32 {strides = array<i32>} : memref<24x1xf32, #tpu.memory_space<vmem>>, vector<24x1xf32>,
    %c0_i32_19 = arith.constant 0 : i32
    %34 = arith.cmpi eq, %arg1, %c0_i32_19 : i32
    %35 = arith.extui %34 : i1 to i32
    %c0_i32_20 = arith.constant 0 : i32
    %36 = arith.cmpi ne, %35, %c0_i32_20 : i32
    scf.if %36 {
      %c0_21 = arith.constant 0 : index
      %c0_22 = arith.constant 0 : index
      %37 = vector.load %arg5[%c0_21, %c0_22] : memref<24x1xf32, #tpu.memory_space<vmem>>, vector<24x1xf32>
      %c0_23 = arith.constant 0 : index
      %c0_24 = arith.constant 0 : index
      %38 = vector.load %arg6[%c0_23, %c0_24] : memref<24x1xf32, #tpu.memory_space<vmem>>, vector<24x1xf32>
      %39 = math.log %38 : vector<24x1xf32>
      %40 = arith.addf %37, %39 : vector<24x1xf32>
      %c-100_i32 = arith.constant -100 : i32
      %41 = vector.broadcast %c-100_i32 : i32 to vector<24x1xi32>
      %42 = arith.cmpi ne, %4, %41 : vector<24x1xi32>
      %c0_25 = arith.constant 0 : index
      %c0_26 = arith.constant 0 : index
      %43 = vector.load %arg7[%c0_25, %c0_26] : memref<24x1xf32, #tpu.memory_space<vmem>>, vector<24x1xf32>
      %44 = arith.subf %40, %43 : vector<24x1xf32>
      %cst_27 = arith.constant 0.000000e+00 : f32
      %45 = vector.broadcast %cst_27 : f32 to vector<24x1xf32>
      %46 = arith.select %42, %44, %45 : vector<24x1xi1>, vector<24x1xf32>
      %47 = vector.shape_cast %46 : vector<24x1xf32> to vector<1x24x1xf32>
      %cst_28 = arith.constant dense<0.000000e+00> : vector<1xf32>
      %48 = vector.multi_reduction <add>, %47, %cst_28 [1, 2] : vector<1x24x1xf32> to vector<1xf32>
      %49 = vector.shape_cast %48 : vector<1xf32> to vector<1x1x1xf32>
      %50 = vector.extract %49[0, 0, 0] : f32 from vector<1x1x1xf32>
      %51 = arith.extui %42 : vector<24x1xi1> to vector<24x1xi32>
      %52 = arith.sitofp %51 : vector<24x1xi32> to vector<24x1xf32>
      %53 = vector.shape_cast %52 : vector<24x1xf32> to vector<1x24x1xf32>
      %cst_29 = arith.constant dense<0.000000e+00> : vector<1xf32>
      %54 = vector.multi_reduction <add>, %53, %cst_29 [1, 2] : vector<1x24x1xf32> to vector<1xf32>
      %55 = vector.shape_cast %54 : vector<1xf32> to vector<1x1x1xf32>
      %56 = vector.extract %55[0, 0, 0] : f32 from vector<1x1x1xf32>
      %57 = tpu.iota {dimensions = array<i32: 0>} : vector<8x128xi32>
      %58 = tpu.iota {dimensions = array<i32: 1>} : vector<8x128xi32>
      %c0_i32_30 = arith.constant 0 : i32
      %59 = vector.broadcast %c0_i32_30 : i32 to vector<8x128xi32>
      %60 = arith.cmpi eq, %57, %59 : vector<8x128xi32>
      %c0_i32_31 = arith.constant 0 : i32
      %61 = vector.broadcast %c0_i32_31 : i32 to vector<8x128xi32>
      %62 = arith.cmpi eq, %58, %61 : vector<8x128xi32>
      %63 = arith.andi %60, %62 : vector<8x128xi1>
      %c0_i32_32 = arith.constant 0 : i32
      %64 = vector.broadcast %c0_i32_32 : i32 to vector<8x128xi32>
      %65 = arith.cmpi eq, %57, %64 : vector<8x128xi32>
      %c1_i32 = arith.constant 1 : i32
      %66 = vector.broadcast %c1_i32 : i32 to vector<8x128xi32>
      %67 = arith.cmpi eq, %58, %66 : vector<8x128xi32>
      %68 = arith.andi %65, %67 : vector<8x128xi1>
      %cst_33 = arith.constant 0.000000e+00 : f32
      %69 = vector.broadcast %56 : f32 to vector<8x128xf32>
      %70 = vector.broadcast %cst_33 : f32 to vector<8x128xf32>
      %71 = arith.select %68, %69, %70 : vector<8x128xi1>, vector<8x128xf32>
      %72 = vector.broadcast %50 : f32 to vector<8x128xf32>
      %73 = arith.select %63, %72, %71 : vector<8x128xi1>, vector<8x128xf32>
      %c0_34 = arith.constant 0 : index
      %c0_35 = arith.constant 0 : index
      %74 = vector.load %arg4[%c0_34, %c0_35] : memref<8x128xf32, #tpu.memory_space<vmem>>, vector<8x128xf32>
      tpu.vector_store %arg4[%c0_34, %c0_35], %73 {strides = array<i32>} : memref<8x128xf32, #tpu.memory_space<vmem>>, vector<8x128xf32>,
    } else {
    }
    return
  }
  func.func @transform_0(%arg0: i32, %arg1: i32) -> (i32, i32) {
    %c0_i32 = arith.constant 0 : i32
    return %arg0, %arg1 : i32, i32
  }
  func.func @transform_1(%arg0: i32, %arg1: i32) -> (i32, i32) {
    %c0_i32 = arith.constant 0 : i32
    %c0_i32_0 = arith.constant 0 : i32
    return %arg0, %c0_i32 : i32, i32
  }
  func.func @transform_2(%arg0: i32, %arg1: i32) -> (i32, i32) {
    %c0_i32 = arith.constant 0 : i32
    %c0_i32_0 = arith.constant 0 : i32
    return %arg0, %c0_i32 : i32, i32
  }
}

</mosaic_0001>

<llo_original>
// kernel: tpu_custom_call.1
$region0: #{tpu_custom_call.1}
  #allocation0 [shape = 'u32[]', space=smem, size = 0x4, offset = 0x4, fixed_abs, tag = 'smem constant byte address 0x4 - core index']
  #allocation1 [shape = 'u32[72,128]{1,0:T(1,128)}', space=vmem, size = 0x9000, scoped, tag = 'internal scratch']
  #allocation2 [shape = 'f32[24,1]{1,0:T(8,128)}', space=vmem, size = 0x3000, scoped, tag = 'scratch operand']
  #allocation3 [shape = 'f32[24,1]{1,0:T(8,128)}', space=vmem, size = 0x3000, scoped, tag = 'scratch operand']
  #allocation4 [shape = 'f32[24,1]{1,0:T(8,128)}', space=vmem, size = 0x3000, scoped, tag = 'scratch operand']
  %s0 = inlined_call_operand.vmem [shape: f32[24,128], index: 0, kind: input, shape index: {}]
  %s1 = inlined_call_operand.vmem [shape: s32[24,1], index: 1, kind: input, shape index: {}]
  %s2 = inlined_call_operand.hbm [shape: f32[8,128], index: 2, kind: output, shape index: {}]
  %s3 = sld [smem:[#allocation0]]
  $region26: #{tpu_custom_call.1} parent=0
    _
  %s5 = ssub.s32 1, %s3
  %s6 = scalar_select 0, %s5, %s3
  $region1: #{tpu_custom_call.1} parent=0
    #allocation5 [shape = 'u8[4096]{0}', space=vmem, size = 0x1000, scoped, tag = 'output window, operand 0, single buffered']
    #allocation6 [shape = 's32[1]{0}', space=sflag, size = 0x4, scoped, tag = 'scoped memory for tpu_custom_call.1']
    %7 = vsyncpa [#allocation6], 0
    // Predicated region
    $region2: #{tpu_custom_call.1} parent=1 // pred_check
      _
    $region3: #{tpu_custom_call.1} parent=1 // pred_check_branch
      %9 = sbr.rel (0) target = $region5
    $region4: #{tpu_custom_call.1} parent=1 // pred_region
      _
    $region5: #{tpu_custom_call.1} parent=1 // pred_fallthru
      _
    // Predicated region
    $region6: #{tpu_custom_call.1} parent=1 // pred_check
      _
    $region7: #{tpu_custom_call.1} parent=1 // pred_check_branch
      %11 = sbr.rel (0) target = $region9
    $region8: #{tpu_custom_call.1} parent=1 // pred_region
      _
    $region9: #{tpu_custom_call.1} parent=1 // pred_fallthru
      _
    %p12 = scmp.eq.s32.totalorder 0, 0
    // Predicated region
    $region10: #{tpu_custom_call.1} parent=1 // pred_check
      %p13 = pneg %p12
    $region11: #{tpu_custom_call.1} parent=1 // pred_check_branch
      %15 = sbr.rel (%p13) target = $region13
    $region12: #{tpu_custom_call.1} parent=1 // pred_region
      %vm16 = vcmask 7168
      %17 = vst.msk [vmem:[#allocation2] sm:$0xff] %vm16, -1e+30
      %18 = vst.msk [vmem:[#allocation2 + $0x8] sm:$0xff] %vm16, -1e+30
      %19 = vst.msk [vmem:[#allocation2 + $0x10] sm:$0xff] %vm16, -1e+30
      %20 = vst.msk [vmem:[#allocation3] sm:$0xff] %vm16, 0.0
      %21 = vst.msk [vmem:[#allocation3 + $0x8] sm:$0xff] %vm16, 0.0
      %22 = vst.msk [vmem:[#allocation3 + $0x10] sm:$0xff] %vm16, 0.0
      %23 = vst.msk [vmem:[#allocation4] sm:$0xff] %vm16, 0.0
      %24 = vst.msk [vmem:[#allocation4 + $0x8] sm:$0xff] %vm16, 0.0
      %25 = vst.msk [vmem:[#allocation4 + $0x10] sm:$0xff] %vm16, 0.0
    $region13: #{tpu_custom_call.1} parent=1 // pred_fallthru
      _
    %v26 = vld [vmem:[%s0] sm:$0xff]
    %v27 = vld [vmem:[%s0 + $0x8] sm:$0xff]
    %v28 = vld [vmem:[%s0 + $0x10] sm:$0xff]
    %v29 = vld [vmem:[%s1] sm:$0xff]
    %v30 = vld [vmem:[%s1 + $0x8] sm:$0xff]
    %v31 = vld [vmem:[%s1 + $0x10] sm:$0xff]
    %32 = vmax.xlane.f32.xlu0 %v26
    %v33 = vpop.xlane.xlu0 %32
    %34 = vmax.xlane.f32.xlu0 %v27
    %v35 = vpop.xlane.xlu0 %34
    %36 = vmax.xlane.f32.xlu0 %v28
    %v37 = vpop.xlane.xlu0 %36
    %v38 = vld [vmem:[#allocation2] sm:$0xff]
    %v39 = vld [vmem:[#allocation2 + $0x8] sm:$0xff]
    %v40 = vld [vmem:[#allocation2 + $0x10] sm:$0xff]
    %v41 = vmax.f32 %v38, %v33
    %v42 = vmax.f32 %v39, %v35
    %v43 = vmax.f32 %v40, %v37
    %v44 = vld [vmem:[#allocation3] sm:$0xff]
    %v45 = vld [vmem:[#allocation3 + $0x8] sm:$0xff]
    %v46 = vld [vmem:[#allocation3 + $0x10] sm:$0xff]
    %v47 = vsub.f32 %v38, %v41
    %v48 = vsub.f32 %v39, %v42
    %v49 = vsub.f32 %v40, %v43
    %v50 = vmul.f32 %v47, 1.442695
    %v51 = vpow.pop %v50
    %v52 = vmul.f32 %v48, 1.442695
    %v53 = vpow.pop %v52
    %v54 = vmul.f32 %v49, 1.442695
    %v55 = vpow.pop %v54
    %v56 = vmul.f32 %v44, %v51
    %v57 = vmul.f32 %v45, %v53
    %v58 = vmul.f32 %v46, %v55
    %60 = vset.pattern.permute.xlu0 0
    %61 = vperm.xlu0 %60, %v41
    %v62 = vpop.permute.xlu0 %61
    %65 = vset.pattern.permute.xlu0 0
    %66 = vperm.xlu0 %65, %v42
    %v67 = vpop.permute.xlu0 %66
    %70 = vset.pattern.permute.xlu0 0
    %71 = vperm.xlu0 %70, %v43
    %v72 = vpop.permute.xlu0 %71
    %v74 = vsub.f32 %v26, %v62
    %v75 = vsub.f32 %v27, %v67
    %v76 = vsub.f32 %v28, %v72
    %v77 = vmul.f32 %v74, 1.442695
    %v78 = vpow.pop %v77
    %v79 = vmul.f32 %v75, 1.442695
    %v80 = vpow.pop %v79
    %v81 = vmul.f32 %v76, 1.442695
    %v82 = vpow.pop %v81
    %83 = vadd.xlane.f32.xlu0 %v78
    %v84 = vpop.xlane.xlu0 %83
    %85 = vadd.xlane.f32.xlu0 %v80
    %v86 = vpop.xlane.xlu0 %85
    %87 = vadd.xlane.f32.xlu0 %v82
    %v88 = vpop.xlane.xlu0 %87
    %v89 = vadd.f32 %v56, %v84
    %v90 = vadd.f32 %v57, %v86
    %v91 = vadd.f32 %v58, %v88
    %vm92 = vcmask 7168
    %93 = vst.msk [vmem:[#allocation3] sm:$0xff] %vm92, %v89
    %94 = vst.msk [vmem:[#allocation3 + $0x8] sm:$0xff] %vm92, %v90
    %95 = vst.msk [vmem:[#allocation3 + $0x10] sm:$0xff] %vm92, %v91
    %96 = vst.msk [vmem:[#allocation2] sm:$0xff] %vm92, %v41
    %97 = vst.msk [vmem:[#allocation2 + $0x8] sm:$0xff] %vm92, %v42
    %98 = vst.msk [vmem:[#allocation2 + $0x10] sm:$0xff] %vm92, %v43
    %s99 = smul.u32 0, 128
    %v100 = vlaneseq
    %v101 = vand.u32 %v100, 127
    %v102 = vstv %s99
    %v103 = vadd.s32 %v102, %v101
    %104 = vset.pattern.permute.xlu0 0
    %105 = vperm.xlu0 %104, %v29
    %v106 = vpop.permute.xlu0 %105
    %107 = vset.pattern.permute.xlu0 0
    %108 = vperm.xlu0 %107, %v30
    %v109 = vpop.permute.xlu0 %108
    %110 = vset.pattern.permute.xlu0 0
    %111 = vperm.xlu0 %110, %v31
    %v112 = vpop.permute.xlu0 %111
    %vm113 = vcmp.eq.s32.totalorder %v103, %v106
    %vm114 = vcmp.eq.s32.totalorder %v103, %v109
    %vm115 = vcmp.eq.s32.totalorder %v103, %v112
    %v116 = vld [vmem:[#allocation4] sm:$0xff]
    %v117 = vld [vmem:[#allocation4 + $0x8] sm:$0xff]
    %v118 = vld [vmem:[#allocation4 + $0x10] sm:$0xff]
    %v119 = vsel %vm113, %v26, 0.0
    %v120 = vsel %vm114, %v27, 0.0
    %v121 = vsel %vm115, %v28, 0.0
    %122 = vadd.xlane.f32.xlu0 %v119
    %v123 = vpop.xlane.xlu0 %122
    %124 = vadd.xlane.f32.xlu0 %v120
    %v125 = vpop.xlane.xlu0 %124
    %126 = vadd.xlane.f32.xlu0 %v121
    %v127 = vpop.xlane.xlu0 %126
    %v128 = vadd.f32 %v116, %v123
    %v129 = vadd.f32 %v117, %v125
    %v130 = vadd.f32 %v118, %v127
    %131 = vst.msk [vmem:[#allocation4] sm:$0xff] %vm92, %v128
    %132 = vst.msk [vmem:[#allocation4 + $0x8] sm:$0xff] %vm92, %v129
    %133 = vst.msk [vmem:[#allocation4 + $0x10] sm:$0xff] %vm92, %v130
    // Predicated region
    $region14: #{tpu_custom_call.1} parent=1 // pred_check
      %p134 = pneg %p12
    $region15: #{tpu_custom_call.1} parent=1 // pred_check_branch
      %136 = sbr.rel (%p134) target = $region17
    $region16: #{tpu_custom_call.1} parent=1 // pred_region
      %v137 = vld [vmem:[#allocation2] sm:$0xff]
      %v138 = vld [vmem:[#allocation2 + $0x8] sm:$0xff]
      %v139 = vld [vmem:[#allocation2 + $0x10] sm:$0xff]
      %v140 = vld [vmem:[#allocation3] sm:$0xff]
      %v141 = vld [vmem:[#allocation3 + $0x8] sm:$0xff]
      %v142 = vld [vmem:[#allocation3 + $0x10] sm:$0xff]
      %v143 = vlog2.pop %v140
      %v144 = vmul.f32 %v143, 0.6931472
      %v145 = vlog2.pop %v141
      %v146 = vmul.f32 %v145, 0.6931472
      %v147 = vlog2.pop %v142
      %v148 = vmul.f32 %v147, 0.6931472
      %v149 = vadd.f32 %v137, %v144
      %v150 = vadd.f32 %v138, %v146
      %v151 = vadd.f32 %v139, %v148
      %vm152 = vcmp.ne.s32.totalorder %v29, 4294967196
      %vm153 = vcmp.ne.s32.totalorder %v30, 4294967196
      %vm154 = vcmp.ne.s32.totalorder %v31, 4294967196
      %v155 = vld [vmem:[#allocation4] sm:$0xff]
      %v156 = vld [vmem:[#allocation4 + $0x8] sm:$0xff]
      %v157 = vld [vmem:[#allocation4 + $0x10] sm:$0xff]
      %v158 = vsub.f32 %v149, %v155
      %v159 = vsub.f32 %v150, %v156
      %v160 = vsub.f32 %v151, %v157
      %v161 = vsel %vm152, %v158, 0.0
      %v162 = vsel %vm153, %v159, 0.0
      %v163 = vsel %vm154, %v160, 0.0
      %v164 = vsel %vm92, %v161, 0.0
      %v165 = vsel %vm92, %v162, 0.0
      %v166 = vadd.f32 %v164, %v165
      %v167 = vsel %vm92, %v163, 0.0
      %v168 = vadd.f32 %v166, %v167
      %169 = vadd.xlane.f32.xlu0 %v168
      %v170 = vpop.xlane.xlu0 %169
      %v171 = vrot.slane %v170, 4
      %v172 = vadd.f32 %v170, %v171
      %v173 = vrot.slane %v172, 2
      %v174 = vadd.f32 %v172, %v173
      %v175 = vrot.slane %v174, 1
      %v176 = vadd.f32 %v174, %v175
      %s177 = vtos %v176
      %v178 = vsel %vm152, 1, 0
      %v179 = vsel %vm153, 1, 0
      %v180 = vsel %vm154, 1, 0
      %v181 = vcvt.s32.f32 %v178
      %v182 = vcvt.s32.f32 %v179
      %v183 = vcvt.s32.f32 %v180
      %v184 = vsel %vm92, %v181, 0.0
      %v185 = vsel %vm92, %v182, 0.0
      %v186 = vadd.f32 %v184, %v185
      %v187 = vsel %vm92, %v183, 0.0
      %v188 = vadd.f32 %v186, %v187
      %189 = vadd.xlane.f32.xlu0 %v188
      %v190 = vpop.xlane.xlu0 %189
      %v191 = vrot.slane %v190, 4
      %v192 = vadd.f32 %v190, %v191
      %v193 = vrot.slane %v192, 2
      %v194 = vadd.f32 %v192, %v193
      %v195 = vrot.slane %v194, 1
      %v196 = vadd.f32 %v194, %v195
      %s197 = vtos %v196
      %v198 = vlaneseq
      %v199 = vshrl.u32 %v198, 7
      %vm200 = vcmp.eq.s32.totalorder %v199, 0
      %vm201 = vcmp.eq.s32.totalorder %v101, 0
      %vm202 = vmand %vm200, %vm201
      %vm203 = vcmp.eq.s32.totalorder %v101, 1
      %vm204 = vmand %vm200, %vm203
      %v205 = vstv %s197
      %v206 = vsel %vm204, %v205, 0.0
      %v207 = vstv %s177
      %v208 = vsel %vm202, %v207, %v206
      %209 = vst [vmem:[#allocation5] sm:$0xff] %v208
    $region17: #{tpu_custom_call.1} parent=1 // pred_fallthru
      _
    // Predicated region
    $region18: #{tpu_custom_call.1} parent=1 // pred_check
      _
    $region19: #{tpu_custom_call.1} parent=1 // pred_check_branch
      %211 = sbr.rel (0) target = $region21
    $region20: #{tpu_custom_call.1} parent=1 // pred_region
      %213 = vsyncadd [#allocation6], 0
      %s215 = sshll.u32 [#allocation5], 4
      %s216 = int_to_ptr.vmem [resolvable:$true] %s215
      %s217 = sshll.u32 %s2, 4
      %s218 = int_to_ptr.hbm [resolvable:$true] %s217
      %220 = dma.vmem_to_hbm [thread:$0]  %s216, 128, %s218, [#allocation6]
    $region21: #{tpu_custom_call.1} parent=1 // pred_fallthru
      _
    // Predicated region
    $region22: #{tpu_custom_call.1} parent=1 // pred_check
      _
    $region23: #{tpu_custom_call.1} parent=1 // pred_check_branch
      %222 = sbr.rel (0) target = $region25
    $region24: #{tpu_custom_call.1} parent=1 // pred_region
      %224 = dma.done [#allocation6], 128
    $region25: #{tpu_custom_call.1} parent=1 // pred_fallthru
      _
    %225 = vsyncpa [#allocation6], 1

</llo_original>
